<compile_context>
chip_gen: v7x
topology: tpu7x:2x2x1
jax: 0.10.0
libtpu: 0.0.40
codegen_flags: <defaults>
</compile_context>

<pallas_src>
import functools

import jax
import jax.numpy as jnp
from jax import lax
from jax.experimental import pallas as pl
from jax.experimental.pallas import tpu as pltpu


def _round_up(x, m):
    return (x + m - 1) // m * m


# --------------------------------------------------------------------------- #
# Kernel
# --------------------------------------------------------------------------- #
def litetcn_kernel(x_ref, sw_ref, sb_ref, cw_ref, aff_ref, ew_ref, eb_ref,
                   out_ref, *, num_layers):
    """One batch-group tile of the LiteTCN forward pass (eval mode).

    x_ref  : (M, Kin)       bf16  packed input, M = groups_per_tile * T_pad,
                                  lanes = (packed batch, in_channel)
    sw_ref : (Kin, Hp)      bf16  block-diagonal start_conv weight (k=1)
    sb_ref : (1, Hp)        f32   start_conv bias, tiled across lane segments
    cw_ref : (L, 2*Hp, Hp)  bf16  block-diag dilated-conv taps (BN1 scale folded),
                                  rows [0:Hp] = tap @ h[t-d], rows [Hp:2Hp] = tap @ h[t]
    aff_ref: (L, 3, Hp)     f32   [0]=BN1-folded conv bias, [1]=outer-BN scale,
                                  [2]=outer-BN shift (all lane-tiled)
    ew_ref : (P, Hp)        f32   end_conv weight masked to lane segment p
    eb_ref : (1, 1)         f32   end_conv bias
    out_ref: (1, G, P, Tp)  f32   sigmoid(end_conv(...)), lane-dense in time
    """
    g = out_ref.shape[1]
    pack = out_ref.shape[2]
    t_pad = out_ref.shape[3]

    # start_conv: k=1 Conv1d == one (M, Kin) @ (Kin, Hp) MXU matmul.
    h = (jnp.dot(x_ref[...], sw_ref[...], preferred_element_type=jnp.float32)
         + sb_ref[...])                                          # (M, Hp) f32

    dilation = 1
    for l in range(num_layers):
        # Dilated k=2 conv, full length & right-aligned, both taps fused into a
        # single K = 2*Hp matmul:  y[t] = [h[t-d], h[t]] @ [W0; W1] + b.
        # TODO(synk): rolling the bf16 copy instead of f32 would halve XLU roll
        # volume; kept f32 (proven lowering) since the roll is not the bottleneck.
        hb = h.astype(jnp.bfloat16)
        h_prev = pltpu.roll(h, shift=dilation, axis=0).astype(jnp.bfloat16)
        y = (jnp.dot(jnp.concatenate([h_prev, hb], axis=-1), cw_ref[l],
                     preferred_element_type=jnp.float32)
             + aff_ref[l, 0])                                    # BN1-folded bias
        y = jnp.maximum(y, 0.0)                                  # ReLU
        # TODO(synk): Dropout(p=0.4) is the identity in eval mode; train-mode
        # stochastic masking is not modeled here.
        y = y + h                                                # residual (same rows)
        h = y * aff_ref[l, 1] + aff_ref[l, 2]                    # outer BN as affine
        dilation *= 2

    # end_conv (hidden -> 1) per packed lane segment: VPU multiply + cross-lane
    # reduce, then reshape the per-row column into a lane-dense (G, T_pad) slab
    # so the store is an unmasked, time-wide vst rather than a 1-lane column.
    for p in range(pack):
        z = jnp.sum(h * ew_ref[p], axis=-1, keepdims=True) + eb_ref[...]  # (M, 1)
        out_ref[0, :, p, :] = jax.nn.sigmoid(z).reshape(g, t_pad)


# --------------------------------------------------------------------------- #
# Parameters (synthetic, matching LiteTCN.__init__ shapes)
# --------------------------------------------------------------------------- #
def make_params(key, in_features, hidden, num_layers):
    """Deterministic synthetic parameters matching LiteTCN.__init__ shapes."""
    ks = jax.random.split(key, 8)
    p = {}
    p["start_w"] = 0.3 * jax.random.normal(ks[0], (in_features, hidden), jnp.float32)
    p["start_b"] = 0.1 * jax.random.normal(ks[1], (hidden,), jnp.float32)
    p["conv_w"] = 0.15 * jax.random.normal(
        ks[2], (num_layers, 2, hidden, hidden), jnp.float32)
    p["conv_b"] = 0.1 * jax.random.normal(ks[3], (num_layers, hidden), jnp.float32)

    def bn_params(k):
        gamma = 1.0 + 0.1 * jax.random.normal(k, (num_layers, hidden))
        beta = 0.1 * jax.random.normal(jax.random.fold_in(k, 1), (num_layers, hidden))
        mean = 0.1 * jax.random.normal(jax.random.fold_in(k, 2), (num_layers, hidden))
        var = 0.9 + 0.2 * jax.random.uniform(jax.random.fold_in(k, 3),
                                             (num_layers, hidden))
        return jnp.stack([gamma, beta, mean, var], axis=1).astype(jnp.float32)

    p["bn1"] = bn_params(ks[4])   # BN inside each tcn Sequential
    p["bn2"] = bn_params(ks[5])   # self.bns[l]
    p["end_w"] = 0.3 * jax.random.normal(ks[6], (hidden, 1), jnp.float32)
    p["end_b"] = 0.1 * jax.random.normal(ks[7], (1,), jnp.float32)
    return p


# --------------------------------------------------------------------------- #
# BN folding + block-diagonal lane packing of the weights
# --------------------------------------------------------------------------- #
def fold_and_pad_params(params, pack, eps=1e-5):
    """Fold both BatchNorms into affines; build block-diagonal (lane-packed) weights."""
    in_features, hidden = params["start_w"].shape
    num_layers = params["conv_w"].shape[0]
    hp = _round_up(pack * hidden, 128)
    kin = _round_up(pack * in_features, 8)

    def block_diag(w, rows, cols):
        # `pack` copies of w on the diagonal, zero elsewhere.
        r, c = w.shape
        out = jnp.zeros((rows, cols), jnp.float32)
        for p in range(pack):
            out = out.at[p * r:(p + 1) * r, p * c:(p + 1) * c].set(w)
        return out

    def tile_lanes(v):
        # (..., hidden) -> (..., hp): `pack` copies across lanes, zero padded.
        t = jnp.concatenate([v] * pack, axis=-1)
        padw = [(0, 0)] * (t.ndim - 1) + [(0, hp - pack * hidden)]
        return jnp.pad(t, padw)

    g1, b1, m1, v1 = (params["bn1"][:, i, :] for i in range(4))
    s1 = g1 * lax.rsqrt(v1 + eps)
    t1 = b1 - m1 * s1
    g2, b2, m2, v2 = (params["bn2"][:, i, :] for i in range(4))
    s2 = g2 * lax.rsqrt(v2 + eps)
    t2 = b2 - m2 * s2

    cw = params["conv_w"] * s1[:, None, None, :]   # fold BN1 scale into output cols
    cb = params["conv_b"] * s1 + t1                # fold BN1 into the conv bias

    sw = block_diag(params["start_w"], kin, hp).astype(jnp.bfloat16)
    sb = tile_lanes(params["start_b"])[None, :].astype(jnp.float32)

    cw_layers = []
    for l in range(num_layers):
        taps = [block_diag(cw[l, j], hp, hp) for j in range(2)]   # [W0; W1]
        cw_layers.append(jnp.concatenate(taps, axis=0))           # (2*hp, hp)
    cwp = jnp.stack(cw_layers, axis=0).astype(jnp.bfloat16)       # (L, 2*hp, hp)

    aff = jnp.stack([tile_lanes(cb), tile_lanes(s2), tile_lanes(t2)],
                    axis=1).astype(jnp.float32)                   # (L, 3, hp)

    ew = jnp.zeros((pack, hp), jnp.float32)
    for p in range(pack):
        ew = ew.at[p, p * hidden:(p + 1) * hidden].set(params["end_w"][:, 0])
    eb = params["end_b"].reshape(1, 1).astype(jnp.float32)
    return sw, sb, cwp, aff, ew, eb


# --------------------------------------------------------------------------- #
# Wrapper
# --------------------------------------------------------------------------- #
def lite_tcn_forward(x, params, num_layers, *, rows_budget=4096):
    """x: (B, T, in_features) f32 -> (B, T_out) sigmoid scores (eval-mode LiteTCN)."""
    B, T, C = x.shape
    hidden = params["start_w"].shape[1]
    rf = 2 ** num_layers                         # receptive field
    t_out = max(T, rf) - (rf - 1)

    # Left-pad time up to the receptive field (matches F.pad in PyTorch) and to
    # a multiple of 8 so the flattened (rows, lanes) activation stays sublane
    # aligned.  Extra left zeros only feed outputs in the invalid prefix.
    tp = _round_up(max(T, rf), 8)
    if tp != T:
        x = jnp.pad(x, ((0, 0), (tp - T, 0), (0, 0)))
    # Invariant for the roll-based dilated conv: contaminated (rolled across a
    # sequence boundary) rows after layer l are exactly the first 2^(l+1)-1 rows
    # of each tp-length sequence; the valid outputs (last t_out steps) never
    # read them as long as tp >= max(T, rf).
    assert tp >= max(T, rf) and tp % 8 == 0

    # Lane packing: put `pack` batch elements side by side in the 128 lanes
    # with block-diagonal weights (hidden=32 -> up to 4x fewer rows / 4x less
    # padded MXU work).  Capped so the grid still has >= 2 steps when B >= 2
    # (v7x megacore sharding + DMA/compute overlap).
    pack_max = max(1, 128 // hidden) if hidden <= 128 else 1
    pack = max(1, min(pack_max, B // 2 if B >= 2 else 1))
    groups = pl.cdiv(B, pack)

    # Batch-group tiling: biggest tile whose live per-row state (~3-4 KB/row of
    # f32/bf16 intermediates) fits comfortably in VMEM on every generation
    # (rows_budget=4096 -> ~12-16 MiB; v7x has only 64 MiB physical), while
    # keeping >= 2 grid steps.  Rows per step stay large enough to amortize the
    # ~0.35 us per-grid-step overhead at production sizes.
    # TODO(synk): the time axis is not tiled; extremely long sequences would
    # need a halo'd time-tiling scheme on top of this.
    g_fit = max(1, rows_budget // tp)
    g_tile = max(1, min(g_fit, groups))
    if groups >= 2:
        g_tile = min(g_tile, pl.cdiv(groups, 2))
    num_tiles = pl.cdiv(groups, g_tile)
    bp = num_tiles * g_tile * pack
    if bp != B:
        x = jnp.pad(x, ((0, bp - B), (0, 0), (0, 0)))

    # Pack input: rows = (tile, group-in-tile, time), lanes = (packed batch, channel).
    kin = _round_up(pack * C, 8)
    xk = (x.reshape(num_tiles * g_tile, pack, tp, C)
            .transpose(0, 2, 1, 3)
            .reshape(num_tiles * g_tile * tp, pack * C))
    if kin != pack * C:
        xk = jnp.pad(xk, ((0, 0), (0, kin - pack * C)))
    xk = xk.astype(jnp.bfloat16)

    weights = fold_and_pad_params(params, pack)
    m = g_tile * tp                              # rows per grid step

    weight_specs = [pl.BlockSpec(w.shape, lambda i, n=w.ndim: (0,) * n)
                    for w in weights]

    # True (unpadded) cost for XLA's scheduler.
    flops = (2 * B * max(T, rf) * (C * hidden + num_layers * 2 * hidden * hidden)
             + 2 * B * t_out * hidden)
    bytes_accessed = (B * T * C * 4 + B * t_out * 4
                      + sum(int(v.size) * 4 for v in params.values()))

    kernel = functools.partial(litetcn_kernel, num_layers=num_layers)
    out = pl.pallas_call(
        kernel,
        out_shape=jax.ShapeDtypeStruct((num_tiles, g_tile, pack, tp), jnp.float32),
        grid=(num_tiles,),
        in_specs=[pl.BlockSpec((m, kin), lambda i: (i, 0))] + weight_specs,
        out_specs=pl.BlockSpec((1, g_tile, pack, tp), lambda i: (i, 0, 0, 0)),
        compiler_params=pltpu.CompilerParams(
            dimension_semantics=("parallel",),
            # Above the 16/32 MiB scoped defaults, below v7x's 64 MiB physical;
            # the rows_budget tile heuristic keeps the working set well inside.
            vmem_limit_bytes=48 * 1024 * 1024),
        cost_estimate=pl.CostEstimate(flops=flops, transcendentals=B * t_out,
                                      bytes_accessed=bytes_accessed),
    )(xk, *weights)

    # Row order of the output is (tile, group, packed-batch) == original batch
    # order; the valid (PyTorch) outputs are the last t_out steps.
    out = out.reshape(bp, tp)
    return out[:B, tp - t_out:]


# --------------------------------------------------------------------------- #
# Pure-JAX reference (faithful f32 port of the PyTorch module, eval mode)
# --------------------------------------------------------------------------- #
def lite_tcn_reference(x, params, num_layers, eps=1e-5):
    B, T, _ = x.shape
    rf = 2 ** num_layers
    if T < rf:
        x = jnp.pad(x, ((0, 0), (rf - T, 0), (0, 0)))
    h = jnp.einsum("btc,ch->bth", x, params["start_w"]) + params["start_b"]
    d = 1
    for l in range(num_layers):
        res = h
        L = h.shape[1]
        y = (jnp.einsum("btc,ch->bth", h[:, :L - d], params["conv_w"][l, 0])
             + jnp.einsum("btc,ch->bth", h[:, d:], params["conv_w"][l, 1])
             + params["conv_b"][l])
        g, b, mu, v = (params["bn1"][l, i] for i in range(4))
        y = (y - mu) * lax.rsqrt(v + eps) * g + b
        y = jnp.maximum(y, 0.0)
        y = y + res[:, d:]
        g, b, mu, v = (params["bn2"][l, i] for i in range(4))
        y = (y - mu) * lax.rsqrt(v + eps) * g + b
        h = y
        d *= 2
    z = jnp.einsum("bth,ho->bto", h, params["end_w"]) + params["end_b"]
    return jax.nn.sigmoid(z[..., 0])


if __name__ == "__main__":
    B, T, IN_FEATURES, HIDDEN, NUM_LAYERS = 4, 16, 4, 32, 3

    key = jax.random.PRNGKey(0)
    kx, kp = jax.random.split(key)
    x = jax.random.normal(kx, (B, T, IN_FEATURES), jnp.float32)
    params = make_params(kp, IN_FEATURES, HIDDEN, NUM_LAYERS)

    out = jax.block_until_ready(lite_tcn_forward(x, params, NUM_LAYERS))

    t_out = T - (2 ** NUM_LAYERS - 1)          # 16 - 7 = 9
    assert out.shape == (B, t_out), out.shape
    assert bool(jnp.all(jnp.isfinite(out)))

    ref = lite_tcn_reference(x, params, NUM_LAYERS)
    err = float(jnp.max(jnp.abs(out - ref)))
    assert err < 3e-2, f"max |kernel - reference| = {err}"   # bf16-matmul tolerance
    print("KERNEL_OK")
</pallas_src>

<mosaic_0001>
module attributes {stable_mosaic.version = 11 : i64} {
  func.func @litetcn_kernel(%arg0: i32, %arg1: memref<16x8xbf16, #tpu.memory_space<vmem>>, %arg2: memref<8x128xbf16, #tpu.memory_space<vmem>>, %arg3: memref<1x128xf32, #tpu.memory_space<vmem>>, %arg4: memref<3x256x128xbf16, #tpu.memory_space<vmem>>, %arg5: memref<3x3x128xf32, #tpu.memory_space<vmem>>, %arg6: memref<2x128xf32, #tpu.memory_space<vmem>>, %arg7: memref<1x1xf32, #tpu.memory_space<vmem>>, %arg8: memref<1x1x2x16xf32, #tpu.memory_space<vmem>>) attributes {dimension_semantics = [#tpu.dimension_semantics<parallel>], iteration_bounds = array<i64: 2>, scalar_prefetch = 0 : i64, scratch_operands = 0 : i64, tpu.core_type = #tpu.core_type<tc>, window_params = [{transform_indices = @transform_0, window_bounds = array<i64: 16, 8>}, {pipeline_mode = #tpu.pipeline_mode<synchronous>, transform_indices = @transform_1, window_bounds = array<i64: 8, 128>}, {pipeline_mode = #tpu.pipeline_mode<synchronous>, transform_indices = @transform_2, window_bounds = array<i64: 1, 128>}, {pipeline_mode = #tpu.pipeline_mode<synchronous>, transform_indices = @transform_3, window_bounds = array<i64: 3, 256, 128>}, {pipeline_mode = #tpu.pipeline_mode<synchronous>, transform_indices = @transform_4, window_bounds = array<i64: 3, 3, 128>}, {pipeline_mode = #tpu.pipeline_mode<synchronous>, transform_indices = @transform_5, window_bounds = array<i64: 2, 128>}, {pipeline_mode = #tpu.pipeline_mode<synchronous>, transform_indices = @transform_6, window_bounds = array<i64: 1, 1>}, {transform_indices = @transform_7, window_bounds = array<i64: 1, 1, 2, 16>}]} {
    %c0 = arith.constant 0 : index
    %c0_0 = arith.constant 0 : index
    %0 = vector.load %arg1[%c0, %c0_0] : memref<16x8xbf16, #tpu.memory_space<vmem>>, vector<16x8xbf16>
    %c0_1 = arith.constant 0 : index
    %c0_2 = arith.constant 0 : index
    %1 = vector.load %arg2[%c0_1, %c0_2] : memref<8x128xbf16, #tpu.memory_space<vmem>>, vector<8x128xbf16>
    %cst = arith.constant dense<0.000000e+00> : vector<16x128xf32>
    %2 = tpu.matmul %0, %1, %cst {dimension_numbers = #tpu.dot_dimension_numbers<[1], [0], [0], [1], [0, 0, 1, 1], [], []>} : vector<16x8xbf16>, vector<8x128xbf16>, vector<16x128xf32> -> vector<16x128xf32>
    %c0_3 = arith.constant 0 : index
    %c0_4 = arith.constant 0 : index
    %3 = vector.load %arg3[%c0_3, %c0_4] : memref<1x128xf32, #tpu.memory_space<vmem>>, vector<1x128xf32>
    %4 = vector.broadcast %3 : vector<1x128xf32> to vector<16x128xf32>
    %5 = arith.addf %2, %4 : vector<16x128xf32>
    %6 = arith.truncf %5 : vector<16x128xf32> to vector<16x128xbf16>
    %c1_i32 = arith.constant 1 : i32
    %7 = tpu.dynamic_rotate %5 by %c1_i32 dim 0 : vector<16x128xf32>, i32 -> vector<16x128xf32>
    %8 = arith.truncf %7 : vector<16x128xf32> to vector<16x128xbf16>
    %9 = tpu.concatenate %8, %6 in 1 : vector<16x128xbf16>, vector<16x128xbf16> -> vector<16x256xbf16>
    %c0_5 = arith.constant 0 : index
    %c0_6 = arith.constant 0 : index
    %c0_7 = arith.constant 0 : index
    %10 = vector.load %arg4[%c0_5, %c0_6, %c0_7] : memref<3x256x128xbf16, #tpu.memory_space<vmem>>, vector<1x256x128xbf16>
    %11 = vector.shape_cast %10 : vector<1x256x128xbf16> to vector<256x128xbf16>
    %cst_8 = arith.constant dense<0.000000e+00> : vector<16x128xf32>
    %12 = tpu.matmul %9, %11, %cst_8 {dimension_numbers = #tpu.dot_dimension_numbers<[1], [0], [0], [1], [0, 0, 1, 1], [], []>} : vector<16x256xbf16>, vector<256x128xbf16>, vector<16x128xf32> -> vector<16x128xf32>
    %c0_9 = arith.constant 0 : index
    %c0_10 = arith.constant 0 : index
    %c0_11 = arith.constant 0 : index
    %13 = vector.load %arg5[%c0_9, %c0_10, %c0_11] : memref<3x3x128xf32, #tpu.memory_space<vmem>>, vector<1x1x128xf32>
    %14 = vector.shape_cast %13 : vector<1x1x128xf32> to vector<128xf32>
    %15 = vector.shape_cast %14 : vector<128xf32> to vector<1x128xf32>
    %16 = vector.broadcast %15 : vector<1x128xf32> to vector<16x128xf32>
    %17 = arith.addf %12, %16 : vector<16x128xf32>
    %cst_12 = arith.constant 0.000000e+00 : f32
    %18 = vector.broadcast %cst_12 : f32 to vector<16x128xf32>
    %19 = arith.maximumf %17, %18 : vector<16x128xf32>
    %20 = arith.addf %19, %5 : vector<16x128xf32>
    %c0_13 = arith.constant 0 : index
    %c1 = arith.constant 1 : index
    %c0_14 = arith.constant 0 : index
    %21 = vector.load %arg5[%c0_13, %c1, %c0_14] : memref<3x3x128xf32, #tpu.memory_space<vmem>>, vector<1x1x128xf32>
    %22 = vector.shape_cast %21 : vector<1x1x128xf32> to vector<128xf32>
    %23 = vector.shape_cast %22 : vector<128xf32> to vector<1x128xf32>
    %24 = vector.broadcast %23 : vector<1x128xf32> to vector<16x128xf32>
    %25 = arith.mulf %20, %24 : vector<16x128xf32>
    %c0_15 = arith.constant 0 : index
    %c2 = arith.constant 2 : index
    %c0_16 = arith.constant 0 : index
    %26 = vector.load %arg5[%c0_15, %c2, %c0_16] : memref<3x3x128xf32, #tpu.memory_space<vmem>>, vector<1x1x128xf32>
    %27 = vector.shape_cast %26 : vector<1x1x128xf32> to vector<128xf32>
    %28 = vector.shape_cast %27 : vector<128xf32> to vector<1x128xf32>
    %29 = vector.broadcast %28 : vector<1x128xf32> to vector<16x128xf32>
    %30 = arith.addf %25, %29 : vector<16x128xf32>
    %31 = arith.truncf %30 : vector<16x128xf32> to vector<16x128xbf16>
    %c2_i32 = arith.constant 2 : i32
    %32 = tpu.dynamic_rotate %30 by %c2_i32 dim 0 : vector<16x128xf32>, i32 -> vector<16x128xf32>
    %33 = arith.truncf %32 : vector<16x128xf32> to vector<16x128xbf16>
    %34 = tpu.concatenate %33, %31 in 1 : vector<16x128xbf16>, vector<16x128xbf16> -> vector<16x256xbf16>
    %c1_17 = arith.constant 1 : index
    %c0_18 = arith.constant 0 : index
    %c0_19 = arith.constant 0 : index
    %35 = vector.load %arg4[%c1_17, %c0_18, %c0_19] : memref<3x256x128xbf16, #tpu.memory_space<vmem>>, vector<1x256x128xbf16>
    %36 = vector.shape_cast %35 : vector<1x256x128xbf16> to vector<256x128xbf16>
    %cst_20 = arith.constant dense<0.000000e+00> : vector<16x128xf32>
    %37 = tpu.matmul %34, %36, %cst_20 {dimension_numbers = #tpu.dot_dimension_numbers<[1], [0], [0], [1], [0, 0, 1, 1], [], []>} : vector<16x256xbf16>, vector<256x128xbf16>, vector<16x128xf32> -> vector<16x128xf32>
    %c1_21 = arith.constant 1 : index
    %c0_22 = arith.constant 0 : index
    %c0_23 = arith.constant 0 : index
    %38 = vector.load %arg5[%c1_21, %c0_22, %c0_23] : memref<3x3x128xf32, #tpu.memory_space<vmem>>, vector<1x1x128xf32>
    %39 = vector.shape_cast %38 : vector<1x1x128xf32> to vector<128xf32>
    %40 = vector.shape_cast %39 : vector<128xf32> to vector<1x128xf32>
    %41 = vector.broadcast %40 : vector<1x128xf32> to vector<16x128xf32>
    %42 = arith.addf %37, %41 : vector<16x128xf32>
    %cst_24 = arith.constant 0.000000e+00 : f32
    %43 = vector.broadcast %cst_24 : f32 to vector<16x128xf32>
    %44 = arith.maximumf %42, %43 : vector<16x128xf32>
    %45 = arith.addf %44, %30 : vector<16x128xf32>
    %c1_25 = arith.constant 1 : index
    %c1_26 = arith.constant 1 : index
    %c0_27 = arith.constant 0 : index
    %46 = vector.load %arg5[%c1_25, %c1_26, %c0_27] : memref<3x3x128xf32, #tpu.memory_space<vmem>>, vector<1x1x128xf32>
    %47 = vector.shape_cast %46 : vector<1x1x128xf32> to vector<128xf32>
    %48 = vector.shape_cast %47 : vector<128xf32> to vector<1x128xf32>
    %49 = vector.broadcast %48 : vector<1x128xf32> to vector<16x128xf32>
    %50 = arith.mulf %45, %49 : vector<16x128xf32>
    %c1_28 = arith.constant 1 : index
    %c2_29 = arith.constant 2 : index
    %c0_30 = arith.constant 0 : index
    %51 = vector.load %arg5[%c1_28, %c2_29, %c0_30] : memref<3x3x128xf32, #tpu.memory_space<vmem>>, vector<1x1x128xf32>
    %52 = vector.shape_cast %51 : vector<1x1x128xf32> to vector<128xf32>
    %53 = vector.shape_cast %52 : vector<128xf32> to vector<1x128xf32>
    %54 = vector.broadcast %53 : vector<1x128xf32> to vector<16x128xf32>
    %55 = arith.addf %50, %54 : vector<16x128xf32>
    %56 = arith.truncf %55 : vector<16x128xf32> to vector<16x128xbf16>
    %c4_i32 = arith.constant 4 : i32
    %57 = tpu.dynamic_rotate %55 by %c4_i32 dim 0 : vector<16x128xf32>, i32 -> vector<16x128xf32>
    %58 = arith.truncf %57 : vector<16x128xf32> to vector<16x128xbf16>
    %59 = tpu.concatenate %58, %56 in 1 : vector<16x128xbf16>, vector<16x128xbf16> -> vector<16x256xbf16>
    %c2_31 = arith.constant 2 : index
    %c0_32 = arith.constant 0 : index
    %c0_33 = arith.constant 0 : index
    %60 = vector.load %arg4[%c2_31, %c0_32, %c0_33] : memref<3x256x128xbf16, #tpu.memory_space<vmem>>, vector<1x256x128xbf16>
    %61 = vector.shape_cast %60 : vector<1x256x128xbf16> to vector<256x128xbf16>
    %cst_34 = arith.constant dense<0.000000e+00> : vector<16x128xf32>
    %62 = tpu.matmul %59, %61, %cst_34 {dimension_numbers = #tpu.dot_dimension_numbers<[1], [0], [0], [1], [0, 0, 1, 1], [], []>} : vector<16x256xbf16>, vector<256x128xbf16>, vector<16x128xf32> -> vector<16x128xf32>
    %c2_35 = arith.constant 2 : index
    %c0_36 = arith.constant 0 : index
    %c0_37 = arith.constant 0 : index
    %63 = vector.load %arg5[%c2_35, %c0_36, %c0_37] : memref<3x3x128xf32, #tpu.memory_space<vmem>>, vector<1x1x128xf32>
    %64 = vector.shape_cast %63 : vector<1x1x128xf32> to vector<128xf32>
    %65 = vector.shape_cast %64 : vector<128xf32> to vector<1x128xf32>
    %66 = vector.broadcast %65 : vector<1x128xf32> to vector<16x128xf32>
    %67 = arith.addf %62, %66 : vector<16x128xf32>
    %cst_38 = arith.constant 0.000000e+00 : f32
    %68 = vector.broadcast %cst_38 : f32 to vector<16x128xf32>
    %69 = arith.maximumf %67, %68 : vector<16x128xf32>
    %70 = arith.addf %69, %55 : vector<16x128xf32>
    %c2_39 = arith.constant 2 : index
    %c1_40 = arith.constant 1 : index
    %c0_41 = arith.constant 0 : index
    %71 = vector.load %arg5[%c2_39, %c1_40, %c0_41] : memref<3x3x128xf32, #tpu.memory_space<vmem>>, vector<1x1x128xf32>
    %72 = vector.shape_cast %71 : vector<1x1x128xf32> to vector<128xf32>
    %73 = vector.shape_cast %72 : vector<128xf32> to vector<1x128xf32>
    %74 = vector.broadcast %73 : vector<1x128xf32> to vector<16x128xf32>
    %75 = arith.mulf %70, %74 : vector<16x128xf32>
    %c2_42 = arith.constant 2 : index
    %c2_43 = arith.constant 2 : index
    %c0_44 = arith.constant 0 : index
    %76 = vector.load %arg5[%c2_42, %c2_43, %c0_44] : memref<3x3x128xf32, #tpu.memory_space<vmem>>, vector<1x1x128xf32>
    %77 = vector.shape_cast %76 : vector<1x1x128xf32> to vector<128xf32>
    %78 = vector.shape_cast %77 : vector<128xf32> to vector<1x128xf32>
    %79 = vector.broadcast %78 : vector<1x128xf32> to vector<16x128xf32>
    %80 = arith.addf %75, %79 : vector<16x128xf32>
    %c0_45 = arith.constant 0 : index
    %c0_46 = arith.constant 0 : index
    %81 = vector.load %arg6[%c0_45, %c0_46] : memref<2x128xf32, #tpu.memory_space<vmem>>, vector<1x128xf32>
    %82 = vector.shape_cast %81 : vector<1x128xf32> to vector<128xf32>
    %83 = vector.shape_cast %82 : vector<128xf32> to vector<1x128xf32>
    %84 = vector.broadcast %83 : vector<1x128xf32> to vector<16x128xf32>
    %85 = arith.mulf %80, %84 : vector<16x128xf32>
    %cst_47 = arith.constant dense<0.000000e+00> : vector<16xf32>
    %86 = vector.multi_reduction <add>, %85, %cst_47 [1] : vector<16x128xf32> to vector<16xf32>
    %87 = vector.shape_cast %86 : vector<16xf32> to vector<16x1xf32>
    %c0_48 = arith.constant 0 : index
    %c0_49 = arith.constant 0 : index
    %88 = vector.load %arg7[%c0_48, %c0_49] : memref<1x1xf32, #tpu.memory_space<vmem>>, vector<1x1xf32>
    %89 = vector.broadcast %88 : vector<1x1xf32> to vector<16x1xf32>
    %90 = arith.addf %87, %89 : vector<16x1xf32>
    %91 = arith.negf %90 : vector<16x1xf32>
    %92 = math.exp %91 : vector<16x1xf32>
    %cst_50 = arith.constant 1.000000e+00 : f32
    %93 = vector.broadcast %cst_50 : f32 to vector<16x1xf32>
    %94 = arith.addf %93, %92 : vector<16x1xf32>
    %95 = arith.divf %93, %94 : vector<16x1xf32>
    %96 = vector.shape_cast %95 : vector<16x1xf32> to vector<1x16xf32>
    %c0_51 = arith.constant 0 : index
    %c0_52 = arith.constant 0 : index
    %c0_53 = arith.constant 0 : index
    %c0_54 = arith.constant 0 : index
    %97 = vector.load %arg8[%c0_51, %c0_52, %c0_53, %c0_54] : memref<1x1x2x16xf32, #tpu.memory_space<vmem>>, vector<1x1x1x16xf32>
    %98 = vector.shape_cast %97 : vector<1x1x1x16xf32> to vector<1x16xf32>
    %99 = vector.shape_cast %96 : vector<1x16xf32> to vector<1x1x1x16xf32>
    tpu.vector_store %arg8[%c0_51, %c0_52, %c0_53, %c0_54], %99 {strides = array<i32>} : memref<1x1x2x16xf32, #tpu.memory_space<vmem>>, vector<1x1x1x16xf32>,
    %c1_55 = arith.constant 1 : index
    %c0_56 = arith.constant 0 : index
    %100 = vector.load %arg6[%c1_55, %c0_56] : memref<2x128xf32, #tpu.memory_space<vmem>>, vector<1x128xf32>
    %101 = vector.shape_cast %100 : vector<1x128xf32> to vector<128xf32>
    %102 = vector.shape_cast %101 : vector<128xf32> to vector<1x128xf32>
    %103 = vector.broadcast %102 : vector<1x128xf32> to vector<16x128xf32>
    %104 = arith.mulf %80, %103 : vector<16x128xf32>
    %cst_57 = arith.constant dense<0.000000e+00> : vector<16xf32>
    %105 = vector.multi_reduction <add>, %104, %cst_57 [1] : vector<16x128xf32> to vector<16xf32>
    %106 = vector.shape_cast %105 : vector<16xf32> to vector<16x1xf32>
    %c0_58 = arith.constant 0 : index
    %c0_59 = arith.constant 0 : index
    %107 = vector.load %arg7[%c0_58, %c0_59] : memref<1x1xf32, #tpu.memory_space<vmem>>, vector<1x1xf32>
    %108 = vector.broadcast %107 : vector<1x1xf32> to vector<16x1xf32>
    %109 = arith.addf %106, %108 : vector<16x1xf32>
    %110 = arith.negf %109 : vector<16x1xf32>
    %111 = math.exp %110 : vector<16x1xf32>
    %cst_60 = arith.constant 1.000000e+00 : f32
    %112 = vector.broadcast %cst_60 : f32 to vector<16x1xf32>
    %113 = arith.addf %112, %111 : vector<16x1xf32>
    %114 = arith.divf %112, %113 : vector<16x1xf32>
    %115 = vector.shape_cast %114 : vector<16x1xf32> to vector<1x16xf32>
    %c0_61 = arith.constant 0 : index
    %c0_62 = arith.constant 0 : index
    %c1_63 = arith.constant 1 : index
    %c0_64 = arith.constant 0 : index
    %116 = vector.load %arg8[%c0_61, %c0_62, %c1_63, %c0_64] : memref<1x1x2x16xf32, #tpu.memory_space<vmem>>, vector<1x1x1x16xf32>
    %117 = vector.shape_cast %116 : vector<1x1x1x16xf32> to vector<1x16xf32>
    %118 = vector.shape_cast %115 : vector<1x16xf32> to vector<1x1x1x16xf32>
    tpu.vector_store %arg8[%c0_61, %c0_62, %c1_63, %c0_64], %118 {strides = array<i32>} : memref<1x1x2x16xf32, #tpu.memory_space<vmem>>, vector<1x1x1x16xf32>,
    return
  }
  func.func @transform_0(%arg0: i32) -> (i32, i32) {
    %c0_i32 = arith.constant 0 : i32
    %c0_i32_0 = arith.constant 0 : i32
    return %arg0, %c0_i32 : i32, i32
  }
  func.func @transform_1(%arg0: i32) -> (i32, i32) {
    %c0_i32 = arith.constant 0 : i32
    %c0_i32_0 = arith.constant 0 : i32
    %c0_i32_1 = arith.constant 0 : i32
    return %c0_i32, %c0_i32_0 : i32, i32
  }
  func.func @transform_2(%arg0: i32) -> (i32, i32) {
    %c0_i32 = arith.constant 0 : i32
    %c0_i32_0 = arith.constant 0 : i32
    %c0_i32_1 = arith.constant 0 : i32
    return %c0_i32, %c0_i32_0 : i32, i32
  }
  func.func @transform_3(%arg0: i32) -> (i32, i32, i32) {
    %c0_i32 = arith.constant 0 : i32
    %c0_i32_0 = arith.constant 0 : i32
    %c0_i32_1 = arith.constant 0 : i32
    %c0_i32_2 = arith.constant 0 : i32
    return %c0_i32, %c0_i32_0, %c0_i32_1 : i32, i32, i32
  }
  func.func @transform_4(%arg0: i32) -> (i32, i32, i32) {
    %c0_i32 = arith.constant 0 : i32
    %c0_i32_0 = arith.constant 0 : i32
    %c0_i32_1 = arith.constant 0 : i32
    %c0_i32_2 = arith.constant 0 : i32
    return %c0_i32, %c0_i32_0, %c0_i32_1 : i32, i32, i32
  }
  func.func @transform_5(%arg0: i32) -> (i32, i32) {
    %c0_i32 = arith.constant 0 : i32
    %c0_i32_0 = arith.constant 0 : i32
    %c0_i32_1 = arith.constant 0 : i32
    return %c0_i32, %c0_i32_0 : i32, i32
  }
  func.func @transform_6(%arg0: i32) -> (i32, i32) {
    %c0_i32 = arith.constant 0 : i32
    %c0_i32_0 = arith.constant 0 : i32
    %c0_i32_1 = arith.constant 0 : i32
    return %c0_i32, %c0_i32_0 : i32, i32
  }
  func.func @transform_7(%arg0: i32) -> (i32, i32, i32, i32) {
    %c0_i32 = arith.constant 0 : i32
    %c0_i32_0 = arith.constant 0 : i32
    %c0_i32_1 = arith.constant 0 : i32
    %c0_i32_2 = arith.constant 0 : i32
    return %arg0, %c0_i32, %c0_i32_0, %c0_i32_1 : i32, i32, i32, i32
  }
}

</mosaic_0001>

<llo_original>
// kernel: tpu_custom_call.1
$region0: #{tpu_custom_call.1}
  #allocation0 [shape = 'u32[]', space=smem, size = 0x4, offset = 0x4, fixed_abs, tag = 'smem constant byte address 0x4 - core index']
  #allocation1 [shape = 'u32[144,128]{1,0:T(1,128)}', space=vmem, size = 0x12000, scoped, tag = 'internal scratch']
  #allocation2 [shape = 'f32[1,1]{1,0:T(1,128)S(1)}', space=vmem, size = 0x200, scoped, tag = 'scoped memory for tpu_custom_call.1']
  %s0 = inlined_call_operand.vmem [shape: bf16[32,8], index: 0, kind: input, shape index: {}]
  %s1 = inlined_call_operand.vmem [shape: bf16[8,128], index: 1, kind: input, shape index: {}]
  %s2 = inlined_call_operand.vmem [shape: f32[1,128], index: 2, kind: input, shape index: {}]
  %s3 = inlined_call_operand.hbm [shape: bf16[3,256,128], index: 3, kind: input, shape index: {}]
  %s4 = inlined_call_operand.vmem [shape: f32[3,3,128], index: 4, kind: input, shape index: {}]
  %s5 = inlined_call_operand.vmem [shape: f32[2,128], index: 5, kind: input, shape index: {}]
  %s6 = inlined_call_operand.<no memory space> [shape: f32[1,1], index: 6, kind: input, shape index: {}]
  %s7 = inlined_call_operand.hbm [shape: f32[2,1,2,16], index: 7, kind: output, shape index: {}]
  %s8 = sld [smem:[#allocation0]]
  $region65: #{tpu_custom_call.1} parent=0
    _
  %s10 = ssub.s32 1, %s8
  %s11 = scalar_select 0, %s10, %s8
  %v12 = vstv %s6
  %13 = vst [vmem:[#allocation2] sm:$0x1] %v12
  $region1: #{tpu_custom_call.1} parent=0
    #allocation3 [shape = 'u8[196608]{0}', space=vmem, size = 0x30000, scoped, tag = 'input window, operand 3, single buffered']
    #allocation4 [shape = 's32[2]{0}', space=sflag, size = 0x8, scoped, tag = 'scoped memory for tpu_custom_call.1']
    #allocation5 [shape = 's32[2]{0}', space=sflag, size = 0x8, scoped, tag = 'scoped memory for tpu_custom_call.1']
    #allocation6 [shape = 'u8[2048]{0}', space=vmem, size = 0x800, scoped, tag = 'output window, operand 0']
    %14 = vsyncpa [#allocation4], 0
    %15 = vsyncpa [#allocation5], 0
    %s16 = scalar_lea.sflag [#allocation5], 1
    %17 = vsyncpa %s16, 0
    loop: start=0, step=1, limit=4
    $region2: #{tpu_custom_call.1} parent=1 // loop_pre_header
      _
    $region3: #{tpu_custom_call.1} parent=1 // loop_header
      %s19 = sphi 0, %s23
      %p20 = scmp.ge.s32.totalorder %s19, 4
      %s29 = sphi 0, %s31
      %s32 = sphi 0, %s29
      %s33 = sphi 0, %s32
      %s49 = sphi 0, %s33
      %s53 = sphi 0, %s53
      %s55 = sphi 0, %s53
      %s56 = sphi 0, %s55
      %s70 = sphi 0, %s56
      %s74 = sphi 0, %s74
      %s76 = sphi 0, %s74
      %s77 = sphi 0, %s76
      %s91 = sphi 0, %s77
      %s95 = sphi 0, %s95
      %s97 = sphi 0, %s95
      %s98 = sphi 0, %s97
      %s112 = sphi 0, %s98
      %s116 = sphi 0, %s116
      %s118 = sphi 0, %s116
      %s119 = sphi 0, %s118
      %s133 = sphi 0, %s119
      %s137 = sphi 0, %s137
      %s139 = sphi 0, %s137
      %s140 = sphi 0, %s139
      %s154 = sphi 0, %s140
      %s158 = sphi 0, %s158
      %s160 = sphi 0, %s158
      %s161 = sphi 0, %s160
      %s175 = sphi 0, %s161
      %s181 = sphi 0, %s183
      %s184 = sphi 0, %s181
      %s185 = sphi 0, %s184
      %s201 = sphi 0, %s185
    $region4: #{tpu_custom_call.1} parent=1 // loop_header_branch
      %22 = sbr.rel (%p20) target = $region8
    $region5: #{tpu_custom_call.1} parent=1 // loop_body
      %s24 = ssub.s32 %s19, 1
      %s25 = ssub.s32 %s19, 2
      %s26 = sadd.s32 %s19, 1
      %s27 = ssub.s32 %s19, %s26
      %p28 = scmp.eq.s32.totalorder %s27, 0
      %s30 = sadd.s32 %s29, 1
      %s31 = scalar_select %p28, %s29, %s30
      %p34 = pneg %p28
      %p35 = scmp.eq.s32.totalorder %s19, 1
      %p36 = por %p34, %p35
      %p37 = scmp.ne.s32.totalorder %s29, %s32
      %p38 = scmp.eq.s32.totalorder %s19, 0
      %p39 = por %p37, %p38
      %p40 = scmp.ne.s32.totalorder %s29, %s32
      %p41 = scmp.eq.s32.totalorder %s24, 1
      %p42 = por %p40, %p41
      %p43 = scmp.ne.s32.totalorder %s32, %s33
      %p44 = scmp.eq.s32.totalorder %s24, 0
      %p45 = por %p43, %p44
      %p46 = scmp.ne.s32.totalorder %s32, %s33
      %p47 = scmp.eq.s32.totalorder %s25, 1
      %p48 = por %p46, %p47
      %p50 = scmp.ne.s32.totalorder %s33, %s49
      %p51 = scmp.eq.s32.totalorder %s25, 0
      %p52 = por %p50, %p51
      %s54 = sadd.s32 %s53, 1
      %p57 = scmp.eq.s32.totalorder %s19, 1
      %p58 = scmp.ne.s32.totalorder %s53, %s55
      %p59 = scmp.eq.s32.totalorder %s19, 0
      %p60 = por %p58, %p59
      %p61 = scmp.ne.s32.totalorder %s53, %s55
      %p62 = scmp.eq.s32.totalorder %s24, 1
      %p63 = por %p61, %p62
      %p64 = scmp.ne.s32.totalorder %s55, %s56
      %p65 = scmp.eq.s32.totalorder %s24, 0
      %p66 = por %p64, %p65
      %p67 = scmp.ne.s32.totalorder %s55, %s56
      %p68 = scmp.eq.s32.totalorder %s25, 1
      %p69 = por %p67, %p68
      %p71 = scmp.ne.s32.totalorder %s56, %s70
      %p72 = scmp.eq.s32.totalorder %s25, 0
      %p73 = por %p71, %p72
      %s75 = sadd.s32 %s74, 1
      %p78 = scmp.eq.s32.totalorder %s19, 1
      %p79 = scmp.ne.s32.totalorder %s74, %s76
      %p80 = scmp.eq.s32.totalorder %s19, 0
      %p81 = por %p79, %p80
      %p82 = scmp.ne.s32.totalorder %s74, %s76
      %p83 = scmp.eq.s32.totalorder %s24, 1
      %p84 = por %p82, %p83
      %p85 = scmp.ne.s32.totalorder %s76, %s77
      %p86 = scmp.eq.s32.totalorder %s24, 0
      %p87 = por %p85, %p86
      %p88 = scmp.ne.s32.totalorder %s76, %s77
      %p89 = scmp.eq.s32.totalorder %s25, 1
      %p90 = por %p88, %p89
      %p92 = scmp.ne.s32.totalorder %s77, %s91
      %p93 = scmp.eq.s32.totalorder %s25, 0
      %p94 = por %p92, %p93
      %s96 = sadd.s32 %s95, 1
      %p99 = scmp.eq.s32.totalorder %s19, 1
      %p100 = scmp.ne.s32.totalorder %s95, %s97
      %p101 = scmp.eq.s32.totalorder %s19, 0
      %p102 = por %p100, %p101
      %p103 = scmp.ne.s32.totalorder %s95, %s97
      %p104 = scmp.eq.s32.totalorder %s24, 1
      %p105 = por %p103, %p104
      %p106 = scmp.ne.s32.totalorder %s97, %s98
      %p107 = scmp.eq.s32.totalorder %s24, 0
      %p108 = por %p106, %p107
      %p109 = scmp.ne.s32.totalorder %s97, %s98
      %p110 = scmp.eq.s32.totalorder %s25, 1
      %p111 = por %p109, %p110
      %p113 = scmp.ne.s32.totalorder %s98, %s112
      %p114 = scmp.eq.s32.totalorder %s25, 0
      %p115 = por %p113, %p114
      %s117 = sadd.s32 %s116, 1
      %p120 = scmp.eq.s32.totalorder %s19, 1
      %p121 = scmp.ne.s32.totalorder %s116, %s118
      %p122 = scmp.eq.s32.totalorder %s19, 0
      %p123 = por %p121, %p122
      %p124 = scmp.ne.s32.totalorder %s116, %s118
      %p125 = scmp.eq.s32.totalorder %s24, 1
      %p126 = por %p124, %p125
      %p127 = scmp.ne.s32.totalorder %s118, %s119
      %p128 = scmp.eq.s32.totalorder %s24, 0
      %p129 = por %p127, %p128
      %p130 = scmp.ne.s32.totalorder %s118, %s119
      %p131 = scmp.eq.s32.totalorder %s25, 1
      %p132 = por %p130, %p131
      %p134 = scmp.ne.s32.totalorder %s119, %s133
      %p135 = scmp.eq.s32.totalorder %s25, 0
      %p136 = por %p134, %p135
      %s138 = sadd.s32 %s137, 1
      %p141 = scmp.eq.s32.totalorder %s19, 1
      %p142 = scmp.ne.s32.totalorder %s137, %s139
      %p143 = scmp.eq.s32.totalorder %s19, 0
      %p144 = por %p142, %p143
      %p145 = scmp.ne.s32.totalorder %s137, %s139
      %p146 = scmp.eq.s32.totalorder %s24, 1
      %p147 = por %p145, %p146
      %p148 = scmp.ne.s32.totalorder %s139, %s140
      %p149 = scmp.eq.s32.totalorder %s24, 0
      %p150 = por %p148, %p149
      %p151 = scmp.ne.s32.totalorder %s139, %s140
      %p152 = scmp.eq.s32.totalorder %s25, 1
      %p153 = por %p151, %p152
      %p155 = scmp.ne.s32.totalorder %s140, %s154
      %p156 = scmp.eq.s32.totalorder %s25, 0
      %p157 = por %p155, %p156
      %s159 = sadd.s32 %s158, 1
      %p162 = scmp.eq.s32.totalorder %s19, 1
      %p163 = scmp.ne.s32.totalorder %s158, %s160
      %p164 = scmp.eq.s32.totalorder %s19, 0
      %p165 = por %p163, %p164
      %p166 = scmp.ne.s32.totalorder %s158, %s160
      %p167 = scmp.eq.s32.totalorder %s24, 1
      %p168 = por %p166, %p167
      %p169 = scmp.ne.s32.totalorder %s160, %s161
      %p170 = scmp.eq.s32.totalorder %s24, 0
      %p171 = por %p169, %p170
      %p172 = scmp.ne.s32.totalorder %s160, %s161
      %p173 = scmp.eq.s32.totalorder %s25, 1
      %p174 = por %p172, %p173
      %p176 = scmp.ne.s32.totalorder %s161, %s175
      %p177 = scmp.eq.s32.totalorder %s25, 0
      %p178 = por %p176, %p177
      %s179 = ssub.s32 %s19, %s26
      %p180 = scmp.eq.s32.totalorder %s179, 0
      %s182 = sadd.s32 %s181, 1
      %s183 = scalar_select %p180, %s181, %s182
      %p186 = pneg %p180
      %p187 = scmp.eq.s32.totalorder %s19, 1
      %p188 = por %p186, %p187
      %p189 = scmp.ne.s32.totalorder %s181, %s184
      %p190 = scmp.eq.s32.totalorder %s19, 0
      %p191 = por %p189, %p190
      %p192 = scmp.ne.s32.totalorder %s181, %s184
      %p193 = scmp.eq.s32.totalorder %s24, 1
      %p194 = por %p192, %p193
      %p195 = scmp.ne.s32.totalorder %s184, %s185
      %p196 = scmp.eq.s32.totalorder %s24, 0
      %p197 = por %p195, %p196
      %p198 = scmp.ne.s32.totalorder %s184, %s185
      %p199 = scmp.eq.s32.totalorder %s25, 1
      %p200 = por %p198, %p199
      %p202 = scmp.ne.s32.totalorder %s185, %s201
      %p203 = scmp.eq.s32.totalorder %s25, 0
      %p204 = por %p202, %p203
      %p205 = scmp.le.s32.totalorder 1, %s19
      %p206 = scmp.lt.s32.totalorder %s19, 3
      %p207 = pnand %p205, %p206
      %p208 = pneg %p207
      // Predicated region
      $region9: #{tpu_custom_call.1} parent=5 // pred_check
        _
      $region10: #{tpu_custom_call.1} parent=5 // pred_check_branch
        %210 = sbr.rel (%p207) target = $region12
      $region11: #{tpu_custom_call.1} parent=5 // pred_region
        %s211 = ssub.s32 %s19, 1
        // Predicated region
        $region13: #{tpu_custom_call.1} parent=11 // pred_check
          %p212 = pneg %p66
        $region14: #{tpu_custom_call.1} parent=11 // pred_check_branch
          %214 = sbr.rel (%p212) target = $region16
        $region15: #{tpu_custom_call.1} parent=11 // pred_region
          _
        $region16: #{tpu_custom_call.1} parent=11 // pred_fallthru
          _
        // Predicated region
        $region17: #{tpu_custom_call.1} parent=11 // pred_check
          %p215 = pneg %p87
        $region18: #{tpu_custom_call.1} parent=11 // pred_check_branch
          %217 = sbr.rel (%p215) target = $region20
        $region19: #{tpu_custom_call.1} parent=11 // pred_region
          _
        $region20: #{tpu_custom_call.1} parent=11 // pred_fallthru
          _
        // Predicated region
        $region21: #{tpu_custom_call.1} parent=11 // pred_check
          %p218 = pneg %p108
        $region22: #{tpu_custom_call.1} parent=11 // pred_check_branch
          %220 = sbr.rel (%p218) target = $region24
        $region23: #{tpu_custom_call.1} parent=11 // pred_region
          %s222 = ssub.s32 6144, 6144
          %223 = vsyncadd [#allocation4], %s222
          %s224 = sshll.u32 [#allocation3], 4
          %s225 = int_to_ptr.vmem [resolvable:$true] %s224
          %230 = dma.hbm_to_vmem [thread:$0]  %s3, 6144, %s225, [#allocation4], 64, 64, 4
        $region24: #{tpu_custom_call.1} parent=11 // pred_fallthru
          _
        // Predicated region
        $region25: #{tpu_custom_call.1} parent=11 // pred_check
          %p231 = pneg %p129
        $region26: #{tpu_custom_call.1} parent=11 // pred_check_branch
          %233 = sbr.rel (%p231) target = $region28
        $region27: #{tpu_custom_call.1} parent=11 // pred_region
          _
        $region28: #{tpu_custom_call.1} parent=11 // pred_fallthru
          _
        // Predicated region
        $region29: #{tpu_custom_call.1} parent=11 // pred_check
          %p234 = pneg %p150
        $region30: #{tpu_custom_call.1} parent=11 // pred_check_branch
          %236 = sbr.rel (%p234) target = $region32
        $region31: #{tpu_custom_call.1} parent=11 // pred_region
          _
        $region32: #{tpu_custom_call.1} parent=11 // pred_fallthru
          _
        // Predicated region
        $region33: #{tpu_custom_call.1} parent=11 // pred_check
          %p237 = pneg %p171
        $region34: #{tpu_custom_call.1} parent=11 // pred_check_branch
          %239 = sbr.rel (%p237) target = $region36
        $region35: #{tpu_custom_call.1} parent=11 // pred_region
          _
        $region36: #{tpu_custom_call.1} parent=11 // pred_fallthru
          _
      $region12: #{tpu_custom_call.1} parent=5 // pred_fallthru
        _
      %p240 = scmp.lt.s32.totalorder %s19, 2
      // Predicated region
      $region37: #{tpu_custom_call.1} parent=5 // pred_check
        %p241 = pneg %p240
      $region38: #{tpu_custom_call.1} parent=5 // pred_check_branch
        %243 = sbr.rel (%p241) target = $region40
      $region39: #{tpu_custom_call.1} parent=5 // pred_region
        // Predicated region
        $region41: #{tpu_custom_call.1} parent=39 // pred_check
          %p244 = pneg %p39
        $region42: #{tpu_custom_call.1} parent=39 // pred_check_branch
          %246 = sbr.rel (%p244) target = $region44
        $region43: #{tpu_custom_call.1} parent=39 // pred_region
          %s247 = smul.u32 2, %s19
          %p248 = scmp.lt.s32.totalorder %s247, 3
          %s249 = scalar_select %p248, %s247, 3
          %s250 = smul.addr %s249, 4
          %s251 = scalar_lea.vmem %s0, %s250
          %s252 = smul.u32 2, %s19
        $region44: #{tpu_custom_call.1} parent=39 // pred_fallthru
          _
      $region40: #{tpu_custom_call.1} parent=5 // pred_fallthru
        _
      %p253 = scmp.le.s32.totalorder 1, %s19
      %p254 = scmp.lt.s32.totalorder %s19, 3
      %p255 = pnand %p253, %p254
      %p256 = pneg %p255
      // Predicated region
      $region45: #{tpu_custom_call.1} parent=5 // pred_check
        _
      $region46: #{tpu_custom_call.1} parent=5 // pred_check_branch
        %258 = sbr.rel (%p255) target = $region48
      $region47: #{tpu_custom_call.1} parent=5 // pred_region
        %s259 = ssub.s32 %s19, 1
        // Predicated region
        $region49: #{tpu_custom_call.1} parent=47 // pred_check
          %p260 = pneg %p108
        $region50: #{tpu_custom_call.1} parent=47 // pred_check_branch
          %262 = sbr.rel (%p260) target = $region52
        $region51: #{tpu_custom_call.1} parent=47 // pred_region
          %263 = dma.done [#allocation4], 6144
        $region52: #{tpu_custom_call.1} parent=47 // pred_fallthru
          _
        %s264 = smul.u32 2, %s24
        %p265 = scmp.lt.s32.totalorder %s264, 3
        %s266 = scalar_select %p265, %s264, 3
        %s267 = smul.addr %s266, 4
        %s268 = scalar_lea.vmem %s0, %s267
        %p269 = pneg %p45
        %p270 = pneg %p42
        %p271 = pneg %p66
        %p272 = pneg %p63
        %p273 = pneg %p87
        %p274 = pneg %p84
        %p275 = pneg %p108
        %p276 = pneg %p105
        %p277 = pneg %p129
        %p278 = pneg %p126
        %p279 = pneg %p150
        %p280 = pneg %p147
        %p281 = pneg %p171
        %p282 = pneg %p168
        %p283 = pneg %p197
        %p284 = pneg %p194
        %s285 = sand.u32 %s184, 1
        %s286 = scalar_lea.sflag [#allocation5], %s285
        %s287 = sand.u32 %s184, 1
        %s288 = smul.addr %s287, 2
        %s289 = scalar_lea.vmem [#allocation6], %s288
        %s290 = smul.u32 2, %s24
        %p291 = scmp.lt.s32.totalorder %s290, 3
        %s292 = scalar_select %p291, %s290, 3
        %s293 = smul.addr %s292, 4
        %s294 = scalar_lea.vmem %s0, %s293
        %s295 = smul.u32 2, %s24
        %v297 = vld [vmem:[%s294] sm:$0xf]
        %v298 = vld [vmem:[%s294 + $0x4] sm:$0xf]
        %v299 = vld [vmem:[%s1] sm:$0xf]
        %v300 = vld [vmem:[%s2] sm:$0x1]
        %v302 = vlaneseq
        %v303 = vshrl.u32 %v302, 7
        %v304 = vsub.s32 0, %v303
        %v305 = vrot.slane %v300, %v304
        %v309 = vunpack.c.l.b16 %v297
        %v310 = vunpack.c.l.b16 %v298
        %v311 = vpack.c.b16 %v310, %v309
        %vm312 = vcmask 64512
        %v314 = vsel %vm312, %v311, 0
        %vm316 = vcmask 1043456
        %v318 = vsel %vm316, %v299, 0
        %320 = vmatprep.subr.bf16.mxu0 0
        %321 = vmatpush1.bf16.msra.mxu0 %v318
        %322 = vmatprep.subr.bf16.mxu0 0
        %323 = vmatpush1.bf16.msra.mxu0 0
        %324 = vmatprep.subr.bf16.mxu0 0
        %325 = vmatpush1.bf16.msra.mxu0 0
        %326 = vmatprep.subr.bf16.mxu0 0
        %327 = vmatpush1.bf16.msra.mxu0 0
        %328 = vmatprep.subr.bf16.mxu0 0
        %329 = vmatpush1.bf16.msra.mxu0 0
        %330 = vmatprep.subr.bf16.mxu0 0
        %331 = vmatpush1.bf16.msra.mxu0 0
        %332 = vmatprep.subr.bf16.mxu0 0
        %333 = vmatpush1.bf16.msra.mxu0 0
        %334 = vmatprep.subr.bf16.mxu0 0
        %335 = vmatpush1.bf16.msra.mxu0 0
        %336 = vmatprep.subr.bf16.mxu0 0
        %337 = vmatpush1.bf16.msra.mxu0 0
        %338 = vmatprep.subr.bf16.mxu0 0
        %339 = vmatpush1.bf16.msra.mxu0 0
        %340 = vmatprep.subr.bf16.mxu0 0
        %341 = vmatpush1.bf16.msra.mxu0 0
        %342 = vmatprep.subr.bf16.mxu0 0
        %343 = vmatpush1.bf16.msra.mxu0 0
        %344 = vmatprep.subr.bf16.mxu0 0
        %345 = vmatpush1.bf16.msra.mxu0 0
        %346 = vmatprep.subr.bf16.mxu0 0
        %347 = vmatpush1.bf16.msra.mxu0 0
        %348 = vmatprep.subr.bf16.mxu0 0
        %349 = vmatpush1.bf16.msra.mxu0 0
        %350 = vmatprep.subr.bf16.mxu0 0
        %351 = vmatpush1.bf16.msra.mxu0 0
        %352 = vmatprep.mubr.bf16.mxu0 0
        %353 = vmatmul.mubr.bf16.gmra.mrb[0].mxu0 %v314
        %v354 = vpop.f32.mrb[0].mxu0
        %v355 = vadd.f32 %v305, %v354
        %v356 = vpop.f32.mrb[0].mxu0
        %v357 = vpop.f32.mrb[0].mxu0
        %v358 = vadd.f32 %v305, %v357
        %v359 = vpop.f32.mrb[0].mxu0
        %360 = vdwg.mxu0
        %v361 = vpack.c.bf16 %v358, %v355
        %v362 = vrot.slane %v355, 7
        %v363 = vrot.slane %v358, 7
        %v364 = vlaneseq
        %v365 = vshrl.u32 %v364, 7
        %vm366 = vcmp.lt.s32.totalorder %v365, 1
        %v367 = vsel %vm366, %v362, %v363
        %v368 = vsel %vm366, %v363, %v362
        %v369 = vpack.c.bf16 %v367, %v368
        %v370 = vld [vmem:[#allocation3] sm:$0xf]
        %v371 = vld [vmem:[#allocation3 + $0x4] sm:$0xf]
        %v372 = vld [vmem:[#allocation3 + $0x8] sm:$0xf]
        %v373 = vld [vmem:[#allocation3 + $0xc] sm:$0xf]
        %v374 = vld [vmem:[#allocation3 + $0x10] sm:$0xf]
        %v375 = vld [vmem:[#allocation3 + $0x14] sm:$0xf]
        %v376 = vld [vmem:[#allocation3 + $0x18] sm:$0xf]
        %v377 = vld [vmem:[#allocation3 + $0x1c] sm:$0xf]
        %v378 = vld [vmem:[#allocation3 + $0x20] sm:$0xf]
        %v379 = vld [vmem:[#allocation3 + $0x24] sm:$0xf]
        %v380 = vld [vmem:[#allocation3 + $0x28] sm:$0xf]
        %v381 = vld [vmem:[#allocation3 + $0x2c] sm:$0xf]
        %v382 = vld [vmem:[#allocation3 + $0x30] sm:$0xf]
        %v383 = vld [vmem:[#allocation3 + $0x34] sm:$0xf]
        %v384 = vld [vmem:[#allocation3 + $0x38] sm:$0xf]
        %v385 = vld [vmem:[#allocation3 + $0x3c] sm:$0xf]
        %v386 = vld [vmem:[#allocation3 + $0x40] sm:$0xf]
        %v387 = vld [vmem:[#allocation3 + $0x44] sm:$0xf]
        %v388 = vld [vmem:[#allocation3 + $0x48] sm:$0xf]
        %v389 = vld [vmem:[#allocation3 + $0x4c] sm:$0xf]
        %v390 = vld [vmem:[#allocation3 + $0x50] sm:$0xf]
        %v391 = vld [vmem:[#allocation3 + $0x54] sm:$0xf]
        %v392 = vld [vmem:[#allocation3 + $0x58] sm:$0xf]
        %v393 = vld [vmem:[#allocation3 + $0x5c] sm:$0xf]
        %v394 = vld [vmem:[#allocation3 + $0x60] sm:$0xf]
        %v395 = vld [vmem:[#allocation3 + $0x64] sm:$0xf]
        %v396 = vld [vmem:[#allocation3 + $0x68] sm:$0xf]
        %v397 = vld [vmem:[#allocation3 + $0x6c] sm:$0xf]
        %v398 = vld [vmem:[#allocation3 + $0x70] sm:$0xf]
        %v399 = vld [vmem:[#allocation3 + $0x74] sm:$0xf]
        %v400 = vld [vmem:[#allocation3 + $0x78] sm:$0xf]
        %v401 = vld [vmem:[#allocation3 + $0x7c] sm:$0xf]
        %v402 = vld [vmem:[%s4] sm:$0x1]
        %v403 = vlaneseq
        %v404 = vshrl.u32 %v403, 7
        %v405 = vsub.s32 0, %v404
        %v406 = vrot.slane %v402, %v405
        %v439 = vunpack.c.l.b16 %v370
        %v440 = vunpack.c.l.b16 %v371
        %v441 = vunpack.c.l.b16 %v372
        %v442 = vunpack.c.l.b16 %v373
        %v443 = vunpack.c.l.b16 %v374
        %v444 = vunpack.c.l.b16 %v375
        %v445 = vunpack.c.l.b16 %v376
        %v446 = vunpack.c.l.b16 %v377
        %v447 = vunpack.c.l.b16 %v378
        %v448 = vunpack.c.l.b16 %v379
        %v449 = vunpack.c.l.b16 %v380
        %v450 = vunpack.c.l.b16 %v381
        %v451 = vunpack.c.l.b16 %v382
        %v452 = vunpack.c.l.b16 %v383
        %v453 = vunpack.c.l.b16 %v384
        %v454 = vunpack.c.l.b16 %v385
        %v455 = vunpack.c.l.b16 %v386
        %v456 = vunpack.c.l.b16 %v387
        %v457 = vunpack.c.l.b16 %v388
        %v458 = vunpack.c.l.b16 %v389
        %v459 = vunpack.c.l.b16 %v390
        %v460 = vunpack.c.l.b16 %v391
        %v461 = vunpack.c.l.b16 %v392
        %v462 = vunpack.c.l.b16 %v393
        %v463 = vunpack.c.l.b16 %v394
        %v464 = vunpack.c.l.b16 %v395
        %v465 = vunpack.c.l.b16 %v396
        %v466 = vunpack.c.l.b16 %v397
        %v467 = vunpack.c.l.b16 %v398
        %v468 = vunpack.c.l.b16 %v399
        %v469 = vunpack.c.l.b16 %v400
        %v470 = vunpack.c.l.b16 %v401
        %v471 = vpack.c.b16 %v440, %v439
        %v472 = vpack.c.b16 %v442, %v441
        %v473 = vpack.c.b16 %v444, %v443
        %v474 = vpack.c.b16 %v446, %v445
        %v475 = vpack.c.b16 %v448, %v447
        %v476 = vpack.c.b16 %v450, %v449
        %v477 = vpack.c.b16 %v452, %v451
        %v478 = vpack.c.b16 %v454, %v453
        %v479 = vpack.c.b16 %v456, %v455
        %v480 = vpack.c.b16 %v458, %v457
        %v481 = vpack.c.b16 %v460, %v459
        %v482 = vpack.c.b16 %v462, %v461
        %v483 = vpack.c.b16 %v464, %v463
        %v484 = vpack.c.b16 %v466, %v465
        %v485 = vpack.c.b16 %v468, %v467
        %v486 = vpack.c.b16 %v470, %v469
        %503 = vmatprep.subr.bf16.mxu0 0
        %504 = vmatpush1.bf16.msra.mxu0 %v471
        %505 = vmatprep.subr.bf16.mxu0 0
        %506 = vmatpush1.bf16.msra.mxu0 %v472
        %507 = vmatprep.subr.bf16.mxu0 0
        %508 = vmatpush1.bf16.msra.mxu0 %v473
        %509 = vmatprep.subr.bf16.mxu0 0
        %510 = vmatpush1.bf16.msra.mxu0 %v474
        %511 = vmatprep.subr.bf16.mxu0 0
        %512 = vmatpush1.bf16.msra.mxu0 %v475
        %513 = vmatprep.subr.bf16.mxu0 0
        %514 = vmatpush1.bf16.msra.mxu0 %v476
        %515 = vmatprep.subr.bf16.mxu0 0
        %516 = vmatpush1.bf16.msra.mxu0 %v477
        %517 = vmatprep.subr.bf16.mxu0 0
        %518 = vmatpush1.bf16.msra.mxu0 %v478
        %519 = vmatprep.subr.bf16.mxu0 0
        %520 = vmatpush1.bf16.msra.mxu0 %v479
        %521 = vmatprep.subr.bf16.mxu0 0
        %522 = vmatpush1.bf16.msra.mxu0 %v480
        %523 = vmatprep.subr.bf16.mxu0 0
        %524 = vmatpush1.bf16.msra.mxu0 %v481
        %525 = vmatprep.subr.bf16.mxu0 0
        %526 = vmatpush1.bf16.msra.mxu0 %v482
        %527 = vmatprep.subr.bf16.mxu0 0
        %528 = vmatpush1.bf16.msra.mxu0 %v483
        %529 = vmatprep.subr.bf16.mxu0 0
        %530 = vmatpush1.bf16.msra.mxu0 %v484
        %531 = vmatprep.subr.bf16.mxu0 0
        %532 = vmatpush1.bf16.msra.mxu0 %v485
        %533 = vmatprep.subr.bf16.mxu0 0
        %534 = vmatpush1.bf16.msra.mxu0 %v486
        %535 = vmatprep.mubr.bf16.mxu0 %v361
        %536 = vmatmul.mubr.bf16.gmra.mrb[0].mxu0 %v369
        %v537 = vpop.f32.mrb[0].mxu0
        %v538 = vadd.f32 %v406, %v537
        %v539 = vpop.f32.mrb[0].mxu0
        %v540 = vpop.f32.mrb[0].mxu0
        %v541 = vadd.f32 %v406, %v540
        %v542 = vpop.f32.mrb[0].mxu0
        %543 = vdwg.mxu0
        %v544 = vmax.f32 %v538, 0.0
        %v545 = vmax.f32 %v541, 0.0
        %v546 = vadd.f32 %v544, %v355
        %v547 = vadd.f32 %v545, %v358
        %v548 = vld [vmem:[%s4 + $0x1] sm:$0x1]
        %v549 = vlaneseq
        %v550 = vshrl.u32 %v549, 7
        %v551 = vsub.s32 0, %v550
        %v552 = vrot.slane %v548, %v551
        %v553 = vmul.f32 %v546, %v552
        %v554 = vmul.f32 %v547, %v552
        %v555 = vld [vmem:[%s4 + $0x2] sm:$0x1]
        %v556 = vlaneseq
        %v557 = vshrl.u32 %v556, 7
        %v558 = vsub.s32 0, %v557
        %v559 = vrot.slane %v555, %v558
        %v560 = vadd.f32 %v553, %v559
        %v561 = vadd.f32 %v554, %v559
        %v562 = vpack.c.bf16 %v561, %v560
        %v563 = vrot.slane %v560, 6
        %v564 = vrot.slane %v561, 6
        %vm565 = vcmp.lt.s32.totalorder %v365, 2
        %v566 = vsel %vm565, %v563, %v564
        %v567 = vsel %vm565, %v564, %v563
        %v568 = vpack.c.bf16 %v566, %v567
        %s569 = scalar_lea.vmem [#allocation3], 128
        %v570 = vld [vmem:[%s569] sm:$0xf]
        %v571 = vld [vmem:[%s569 + $0x4] sm:$0xf]
        %v572 = vld [vmem:[%s569 + $0x8] sm:$0xf]
        %v573 = vld [vmem:[%s569 + $0xc] sm:$0xf]
        %v574 = vld [vmem:[%s569 + $0x10] sm:$0xf]
        %v575 = vld [vmem:[%s569 + $0x14] sm:$0xf]
        %v576 = vld [vmem:[%s569 + $0x18] sm:$0xf]
        %v577 = vld [vmem:[%s569 + $0x1c] sm:$0xf]
        %v578 = vld [vmem:[%s569 + $0x20] sm:$0xf]
        %v579 = vld [vmem:[%s569 + $0x24] sm:$0xf]
        %v580 = vld [vmem:[%s569 + $0x28] sm:$0xf]
        %v581 = vld [vmem:[%s569 + $0x2c] sm:$0xf]
        %v582 = vld [vmem:[%s569 + $0x30] sm:$0xf]
        %v583 = vld [vmem:[%s569 + $0x34] sm:$0xf]
        %v584 = vld [vmem:[%s569 + $0x38] sm:$0xf]
        %v585 = vld [vmem:[%s569 + $0x3c] sm:$0xf]
        %v586 = vld [vmem:[%s569 + $0x40] sm:$0xf]
        %v587 = vld [vmem:[%s569 + $0x44] sm:$0xf]
        %v588 = vld [vmem:[%s569 + $0x48] sm:$0xf]
        %v589 = vld [vmem:[%s569 + $0x4c] sm:$0xf]
        %v590 = vld [vmem:[%s569 + $0x50] sm:$0xf]
        %v591 = vld [vmem:[%s569 + $0x54] sm:$0xf]
        %v592 = vld [vmem:[%s569 + $0x58] sm:$0xf]
        %v593 = vld [vmem:[%s569 + $0x5c] sm:$0xf]
        %v594 = vld [vmem:[%s569 + $0x60] sm:$0xf]
        %v595 = vld [vmem:[%s569 + $0x64] sm:$0xf]
        %v596 = vld [vmem:[%s569 + $0x68] sm:$0xf]
        %v597 = vld [vmem:[%s569 + $0x6c] sm:$0xf]
        %v598 = vld [vmem:[%s569 + $0x70] sm:$0xf]
        %v599 = vld [vmem:[%s569 + $0x74] sm:$0xf]
        %v600 = vld [vmem:[%s569 + $0x78] sm:$0xf]
        %v601 = vld [vmem:[%s569 + $0x7c] sm:$0xf]
        %s602 = scalar_lea.vmem %s4, 4
        %v603 = vld [vmem:[%s602] sm:$0x1]
        %v604 = vlaneseq
        %v605 = vshrl.u32 %v604, 7
        %v606 = vsub.s32 0, %v605
        %v607 = vrot.slane %v603, %v606
        %v640 = vunpack.c.l.b16 %v570
        %v641 = vunpack.c.l.b16 %v571
        %v642 = vunpack.c.l.b16 %v572
        %v643 = vunpack.c.l.b16 %v573
        %v644 = vunpack.c.l.b16 %v574
        %v645 = vunpack.c.l.b16 %v575
        %v646 = vunpack.c.l.b16 %v576
        %v647 = vunpack.c.l.b16 %v577
        %v648 = vunpack.c.l.b16 %v578
        %v649 = vunpack.c.l.b16 %v579
        %v650 = vunpack.c.l.b16 %v580
        %v651 = vunpack.c.l.b16 %v581
        %v652 = vunpack.c.l.b16 %v582
        %v653 = vunpack.c.l.b16 %v583
        %v654 = vunpack.c.l.b16 %v584
        %v655 = vunpack.c.l.b16 %v585
        %v656 = vunpack.c.l.b16 %v586
        %v657 = vunpack.c.l.b16 %v587
        %v658 = vunpack.c.l.b16 %v588
        %v659 = vunpack.c.l.b16 %v589
        %v660 = vunpack.c.l.b16 %v590
        %v661 = vunpack.c.l.b16 %v591
        %v662 = vunpack.c.l.b16 %v592
        %v663 = vunpack.c.l.b16 %v593
        %v664 = vunpack.c.l.b16 %v594
        %v665 = vunpack.c.l.b16 %v595
        %v666 = vunpack.c.l.b16 %v596
        %v667 = vunpack.c.l.b16 %v597
        %v668 = vunpack.c.l.b16 %v598
        %v669 = vunpack.c.l.b16 %v599
        %v670 = vunpack.c.l.b16 %v600
        %v671 = vunpack.c.l.b16 %v601
        %v672 = vpack.c.b16 %v641, %v640
        %v673 = vpack.c.b16 %v643, %v642
        %v674 = vpack.c.b16 %v645, %v644
        %v675 = vpack.c.b16 %v647, %v646
        %v676 = vpack.c.b16 %v649, %v648
        %v677 = vpack.c.b16 %v651, %v650
        %v678 = vpack.c.b16 %v653, %v652
        %v679 = vpack.c.b16 %v655, %v654
        %v680 = vpack.c.b16 %v657, %v656
        %v681 = vpack.c.b16 %v659, %v658
        %v682 = vpack.c.b16 %v661, %v660
        %v683 = vpack.c.b16 %v663, %v662
        %v684 = vpack.c.b16 %v665, %v664
        %v685 = vpack.c.b16 %v667, %v666
        %v686 = vpack.c.b16 %v669, %v668
        %v687 = vpack.c.b16 %v671, %v670
        %704 = vmatprep.subr.bf16.mxu0 0
        %705 = vmatpush1.bf16.msra.mxu0 %v672
        %706 = vmatprep.subr.bf16.mxu0 0
        %707 = vmatpush1.bf16.msra.mxu0 %v673
        %708 = vmatprep.subr.bf16.mxu0 0
        %709 = vmatpush1.bf16.msra.mxu0 %v674
        %710 = vmatprep.subr.bf16.mxu0 0
        %711 = vmatpush1.bf16.msra.mxu0 %v675
        %712 = vmatprep.subr.bf16.mxu0 0
        %713 = vmatpush1.bf16.msra.mxu0 %v676
        %714 = vmatprep.subr.bf16.mxu0 0
        %715 = vmatpush1.bf16.msra.mxu0 %v677
        %716 = vmatprep.subr.bf16.mxu0 0
        %717 = vmatpush1.bf16.msra.mxu0 %v678
        %718 = vmatprep.subr.bf16.mxu0 0
        %719 = vmatpush1.bf16.msra.mxu0 %v679
        %720 = vmatprep.subr.bf16.mxu0 0
        %721 = vmatpush1.bf16.msra.mxu0 %v680
        %722 = vmatprep.subr.bf16.mxu0 0
        %723 = vmatpush1.bf16.msra.mxu0 %v681
        %724 = vmatprep.subr.bf16.mxu0 0
        %725 = vmatpush1.bf16.msra.mxu0 %v682
        %726 = vmatprep.subr.bf16.mxu0 0
        %727 = vmatpush1.bf16.msra.mxu0 %v683
        %728 = vmatprep.subr.bf16.mxu0 0
        %729 = vmatpush1.bf16.msra.mxu0 %v684
        %730 = vmatprep.subr.bf16.mxu0 0
        %731 = vmatpush1.bf16.msra.mxu0 %v685
        %732 = vmatprep.subr.bf16.mxu0 0
        %733 = vmatpush1.bf16.msra.mxu0 %v686
        %734 = vmatprep.subr.bf16.mxu0 0
        %735 = vmatpush1.bf16.msra.mxu0 %v687
        %736 = vmatprep.mubr.bf16.mxu0 %v562
        %737 = vmatmul.mubr.bf16.gmra.mrb[0].mxu0 %v568
        %v738 = vpop.f32.mrb[0].mxu0
        %v739 = vadd.f32 %v607, %v738
        %v740 = vpop.f32.mrb[0].mxu0
        %v741 = vpop.f32.mrb[0].mxu0
        %v742 = vadd.f32 %v607, %v741
        %v743 = vpop.f32.mrb[0].mxu0
        %744 = vdwg.mxu0
        %v745 = vmax.f32 %v739, 0.0
        %v746 = vmax.f32 %v742, 0.0
        %v747 = vadd.f32 %v745, %v560
        %v748 = vadd.f32 %v746, %v561
        %v749 = vld [vmem:[%s602 + $0x1] sm:$0x1]
        %v750 = vlaneseq
        %v751 = vshrl.u32 %v750, 7
        %v752 = vsub.s32 0, %v751
        %v753 = vrot.slane %v749, %v752
        %v754 = vmul.f32 %v747, %v753
        %v755 = vmul.f32 %v748, %v753
        %v756 = vld [vmem:[%s602 + $0x2] sm:$0x1]
        %v757 = vlaneseq
        %v758 = vshrl.u32 %v757, 7
        %v759 = vsub.s32 0, %v758
        %v760 = vrot.slane %v756, %v759
        %v761 = vadd.f32 %v754, %v760
        %v762 = vadd.f32 %v755, %v760
        %v763 = vpack.c.bf16 %v762, %v761
        %v764 = vrot.slane %v761, 4
        %v765 = vrot.slane %v762, 4
        %vm766 = vcmp.lt.s32.totalorder %v365, 4
        %v767 = vsel %vm766, %v764, %v765
        %v768 = vsel %vm766, %v765, %v764
        %v769 = vpack.c.bf16 %v767, %v768
        %s770 = scalar_lea.vmem [#allocation3], 256
        %v771 = vld [vmem:[%s770] sm:$0xf]
        %v772 = vld [vmem:[%s770 + $0x4] sm:$0xf]
        %v773 = vld [vmem:[%s770 + $0x8] sm:$0xf]
        %v774 = vld [vmem:[%s770 + $0xc] sm:$0xf]
        %v775 = vld [vmem:[%s770 + $0x10] sm:$0xf]
        %v776 = vld [vmem:[%s770 + $0x14] sm:$0xf]
        %v777 = vld [vmem:[%s770 + $0x18] sm:$0xf]
        %v778 = vld [vmem:[%s770 + $0x1c] sm:$0xf]
        %v779 = vld [vmem:[%s770 + $0x20] sm:$0xf]
        %v780 = vld [vmem:[%s770 + $0x24] sm:$0xf]
        %v781 = vld [vmem:[%s770 + $0x28] sm:$0xf]
        %v782 = vld [vmem:[%s770 + $0x2c] sm:$0xf]
        %v783 = vld [vmem:[%s770 + $0x30] sm:$0xf]
        %v784 = vld [vmem:[%s770 + $0x34] sm:$0xf]
        %v785 = vld [vmem:[%s770 + $0x38] sm:$0xf]
        %v786 = vld [vmem:[%s770 + $0x3c] sm:$0xf]
        %v787 = vld [vmem:[%s770 + $0x40] sm:$0xf]
        %v788 = vld [vmem:[%s770 + $0x44] sm:$0xf]
        %v789 = vld [vmem:[%s770 + $0x48] sm:$0xf]
        %v790 = vld [vmem:[%s770 + $0x4c] sm:$0xf]
        %v791 = vld [vmem:[%s770 + $0x50] sm:$0xf]
        %v792 = vld [vmem:[%s770 + $0x54] sm:$0xf]
        %v793 = vld [vmem:[%s770 + $0x58] sm:$0xf]
        %v794 = vld [vmem:[%s770 + $0x5c] sm:$0xf]
        %v795 = vld [vmem:[%s770 + $0x60] sm:$0xf]
        %v796 = vld [vmem:[%s770 + $0x64] sm:$0xf]
        %v797 = vld [vmem:[%s770 + $0x68] sm:$0xf]
        %v798 = vld [vmem:[%s770 + $0x6c] sm:$0xf]
        %v799 = vld [vmem:[%s770 + $0x70] sm:$0xf]
        %v800 = vld [vmem:[%s770 + $0x74] sm:$0xf]
        %v801 = vld [vmem:[%s770 + $0x78] sm:$0xf]
        %v802 = vld [vmem:[%s770 + $0x7c] sm:$0xf]
        %s803 = scalar_lea.vmem %s4, 8
        %v804 = vld [vmem:[%s803] sm:$0x1]
        %v805 = vlaneseq
        %v806 = vshrl.u32 %v805, 7
        %v807 = vsub.s32 0, %v806
        %v808 = vrot.slane %v804, %v807
        %v841 = vunpack.c.l.b16 %v771
        %v842 = vunpack.c.l.b16 %v772
        %v843 = vunpack.c.l.b16 %v773
        %v844 = vunpack.c.l.b16 %v774
        %v845 = vunpack.c.l.b16 %v775
        %v846 = vunpack.c.l.b16 %v776
        %v847 = vunpack.c.l.b16 %v777
        %v848 = vunpack.c.l.b16 %v778
        %v849 = vunpack.c.l.b16 %v779
        %v850 = vunpack.c.l.b16 %v780
        %v851 = vunpack.c.l.b16 %v781
        %v852 = vunpack.c.l.b16 %v782
        %v853 = vunpack.c.l.b16 %v783
        %v854 = vunpack.c.l.b16 %v784
        %v855 = vunpack.c.l.b16 %v785
        %v856 = vunpack.c.l.b16 %v786
        %v857 = vunpack.c.l.b16 %v787
        %v858 = vunpack.c.l.b16 %v788
        %v859 = vunpack.c.l.b16 %v789
        %v860 = vunpack.c.l.b16 %v790
        %v861 = vunpack.c.l.b16 %v791
        %v862 = vunpack.c.l.b16 %v792
        %v863 = vunpack.c.l.b16 %v793
        %v864 = vunpack.c.l.b16 %v794
        %v865 = vunpack.c.l.b16 %v795
        %v866 = vunpack.c.l.b16 %v796
        %v867 = vunpack.c.l.b16 %v797
        %v868 = vunpack.c.l.b16 %v798
        %v869 = vunpack.c.l.b16 %v799
        %v870 = vunpack.c.l.b16 %v800
        %v871 = vunpack.c.l.b16 %v801
        %v872 = vunpack.c.l.b16 %v802
        %v873 = vpack.c.b16 %v842, %v841
        %v874 = vpack.c.b16 %v844, %v843
        %v875 = vpack.c.b16 %v846, %v845
        %v876 = vpack.c.b16 %v848, %v847
        %v877 = vpack.c.b16 %v850, %v849
        %v878 = vpack.c.b16 %v852, %v851
        %v879 = vpack.c.b16 %v854, %v853
        %v880 = vpack.c.b16 %v856, %v855
        %v881 = vpack.c.b16 %v858, %v857
        %v882 = vpack.c.b16 %v860, %v859
        %v883 = vpack.c.b16 %v862, %v861
        %v884 = vpack.c.b16 %v864, %v863
        %v885 = vpack.c.b16 %v866, %v865
        %v886 = vpack.c.b16 %v868, %v867
        %v887 = vpack.c.b16 %v870, %v869
        %v888 = vpack.c.b16 %v872, %v871
        %905 = vmatprep.subr.bf16.mxu0 0
        %906 = vmatpush1.bf16.msra.mxu0 %v873
        %907 = vmatprep.subr.bf16.mxu0 0
        %908 = vmatpush1.bf16.msra.mxu0 %v874
        %909 = vmatprep.subr.bf16.mxu0 0
        %910 = vmatpush1.bf16.msra.mxu0 %v875
        %911 = vmatprep.subr.bf16.mxu0 0
        %912 = vmatpush1.bf16.msra.mxu0 %v876
        %913 = vmatprep.subr.bf16.mxu0 0
        %914 = vmatpush1.bf16.msra.mxu0 %v877
        %915 = vmatprep.subr.bf16.mxu0 0
        %916 = vmatpush1.bf16.msra.mxu0 %v878
        %917 = vmatprep.subr.bf16.mxu0 0
        %918 = vmatpush1.bf16.msra.mxu0 %v879
        %919 = vmatprep.subr.bf16.mxu0 0
        %920 = vmatpush1.bf16.msra.mxu0 %v880
        %921 = vmatprep.subr.bf16.mxu0 0
        %922 = vmatpush1.bf16.msra.mxu0 %v881
        %923 = vmatprep.subr.bf16.mxu0 0
        %924 = vmatpush1.bf16.msra.mxu0 %v882
        %925 = vmatprep.subr.bf16.mxu0 0
        %926 = vmatpush1.bf16.msra.mxu0 %v883
        %927 = vmatprep.subr.bf16.mxu0 0
        %928 = vmatpush1.bf16.msra.mxu0 %v884
        %929 = vmatprep.subr.bf16.mxu0 0
        %930 = vmatpush1.bf16.msra.mxu0 %v885
        %931 = vmatprep.subr.bf16.mxu0 0
        %932 = vmatpush1.bf16.msra.mxu0 %v886
        %933 = vmatprep.subr.bf16.mxu0 0
        %934 = vmatpush1.bf16.msra.mxu0 %v887
        %935 = vmatprep.subr.bf16.mxu0 0
        %936 = vmatpush1.bf16.msra.mxu0 %v888
        %937 = vmatprep.mubr.bf16.mxu0 %v763
        %938 = vmatmul.mubr.bf16.gmra.mrb[0].mxu0 %v769
        %v939 = vpop.f32.mrb[0].mxu0
        %v940 = vadd.f32 %v808, %v939
        %v941 = vpop.f32.mrb[0].mxu0
        %v942 = vpop.f32.mrb[0].mxu0
        %v943 = vadd.f32 %v808, %v942
        %v944 = vpop.f32.mrb[0].mxu0
        %945 = vdwg.mxu0
        %v946 = vmax.f32 %v940, 0.0
        %v947 = vmax.f32 %v943, 0.0
        %v948 = vadd.f32 %v946, %v761
        %v949 = vadd.f32 %v947, %v762
        %v950 = vld [vmem:[%s803 + $0x1] sm:$0x1]
        %v951 = vlaneseq
        %v952 = vshrl.u32 %v951, 7
        %v953 = vsub.s32 0, %v952
        %v954 = vrot.slane %v950, %v953
        %v955 = vmul.f32 %v948, %v954
        %v956 = vmul.f32 %v949, %v954
        %v957 = vld [vmem:[%s803 + $0x2] sm:$0x1]
        %v958 = vlaneseq
        %v959 = vshrl.u32 %v958, 7
        %v960 = vsub.s32 0, %v959
        %v961 = vrot.slane %v957, %v960
        %v962 = vadd.f32 %v955, %v961
        %v963 = vadd.f32 %v956, %v961
        %v964 = vld [vmem:[%s5] sm:$0x1]
        %v965 = vlaneseq
        %v966 = vshrl.u32 %v965, 7
        %v967 = vsub.s32 0, %v966
        %v968 = vrot.slane %v964, %v967
        %v969 = vmul.f32 %v962, %v968
        %v970 = vmul.f32 %v963, %v968
        %971 = vadd.xlane.f32.xlu0 %v969
        %v972 = vpop.xlane.xlu0 %971
        %973 = vadd.xlane.f32.xlu0 %v970
        %v974 = vpop.xlane.xlu0 %973
        %v975 = vld [vmem:[#allocation2] sm:$0x1]
        %v977 = vlaneseq
        %v978 = vshrl.u32 %v977, 7
        %v979 = vsub.s32 0, %v978
        %v980 = vrot.slane %v975, %v979
        %v982 = vadd.f32 %v972, %v980
        %v983 = vadd.f32 %v974, %v980
        %v984 = vxor.u32 %v982, 2147483648
        %v985 = vxor.u32 %v983, 2147483648
        %v986 = vmul.f32 %v984, 1.442695
        %v987 = vpow.pop %v986
        %v988 = vmul.f32 %v985, 1.442695
        %v989 = vpow.pop %v988
        %v990 = vadd.f32 %v987, 1.0
        %v991 = vadd.f32 %v989, 1.0
        %v992 = vrcp.pop %v990
        %v993 = vmul.f32 1.0, %v992
        %v994 = vrcp.pop %v991
        %v995 = vmul.f32 1.0, %v994
        %998 = vset.pattern.permute.xlu0 0
        %999 = vperm.xlu0 %998, %v993
        %v1000 = vpop.permute.xlu0 %999
        %1001 = vset.pattern.permute.xlu0 0
        %1002 = vperm.xlu0 %1001, %v995
        %v1003 = vpop.permute.xlu0 %1002
        %v1004 = vlaneseq
        %v1005 = vand.u32 %v1004, 127
        %v1006 = vlaneseq
        %v1007 = vshrl.u32 %v1006, 7
        %v1008 = vsub.s32 %v1005, %v1007
        %v1009 = vrot.slane %v1000, %v1008
        %v1010 = vadd.s32 %v1005, 4294967288
        %v1011 = vlaneseq
        %v1012 = vshrl.u32 %v1011, 7
        %v1013 = vsub.s32 %v1010, %v1012
        %v1014 = vrot.slane %v1003, %v1013
        %vm1015 = vcmask 130112
        %v1016 = vsel %vm1015, %v1014, %v1009
        %vm1018 = vcmask 122880
        %1019 = vst.msk [vmem:[%s289] sm:$0x1] %vm1018, %v1016
        %v1020 = vld [vmem:[%s5 + $0x1] sm:$0x1]
        %v1021 = vlaneseq
        %v1022 = vshrl.u32 %v1021, 7
        %v1023 = vsub.s32 0, %v1022
        %v1024 = vrot.slane %v1020, %v1023
        %v1025 = vmul.f32 %v962, %v1024
        %v1026 = vmul.f32 %v963, %v1024
        %1027 = vadd.xlane.f32.xlu0 %v1025
        %v1028 = vpop.xlane.xlu0 %1027
        %1029 = vadd.xlane.f32.xlu0 %v1026
        %v1030 = vpop.xlane.xlu0 %1029
        %v1031 = vld [vmem:[#allocation2] sm:$0x1]
        %v1033 = vlaneseq
        %v1034 = vshrl.u32 %v1033, 7
        %v1035 = vsub.s32 0, %v1034
        %v1036 = vrot.slane %v1031, %v1035
        %v1038 = vadd.f32 %v1028, %v1036
        %v1039 = vadd.f32 %v1030, %v1036
        %v1040 = vxor.u32 %v1038, 2147483648
        %v1041 = vxor.u32 %v1039, 2147483648
        %v1042 = vmul.f32 %v1040, 1.442695
        %v1043 = vpow.pop %v1042
        %v1044 = vmul.f32 %v1041, 1.442695
        %v1045 = vpow.pop %v1044
        %v1046 = vadd.f32 %v1043, 1.0
        %v1047 = vadd.f32 %v1045, 1.0
        %v1048 = vrcp.pop %v1046
        %v1049 = vmul.f32 1.0, %v1048
        %v1050 = vrcp.pop %v1047
        %v1051 = vmul.f32 1.0, %v1050
        %1054 = vset.pattern.permute.xlu0 0
        %1055 = vperm.xlu0 %1054, %v1049
        %v1056 = vpop.permute.xlu0 %1055
        %1057 = vset.pattern.permute.xlu0 0
        %1058 = vperm.xlu0 %1057, %v1051
        %v1059 = vpop.permute.xlu0 %1058
        %v1060 = vlaneseq
        %v1061 = vshrl.u32 %v1060, 7
        %v1062 = vsub.s32 %v1005, %v1061
        %v1063 = vrot.slane %v1056, %v1062
        %v1064 = vlaneseq
        %v1065 = vshrl.u32 %v1064, 7
        %v1066 = vsub.s32 %v1010, %v1065
        %v1067 = vrot.slane %v1059, %v1066
        %v1068 = vsel %vm1015, %v1067, %v1063
        %1070 = vst.msk [vmem:[%s289 + $0x1] sm:$0x1] %vm1018, %v1068
        %s1071 = sand.u32 %s184, 1
        %s1072 = scalar_lea.sflag [#allocation5], %s1071
        %s1073 = sand.u32 %s184, 1
        %s1074 = smul.addr %s1073, 2
        %s1075 = scalar_lea.vmem [#allocation6], %s1074
        // Predicated region
        $region53: #{tpu_custom_call.1} parent=47 // pred_check
          %p1076 = pneg %p194
        $region54: #{tpu_custom_call.1} parent=47 // pred_check_branch
          %1078 = sbr.rel (%p1076) target = $region56
        $region55: #{tpu_custom_call.1} parent=47 // pred_region
          %s1080 = ssub.s32 32, 32
          %1081 = vsyncadd %s1072, %s1080
          %s1082 = smul.addr %s24, 32
          %s1083 = scalar_lea.hbm %s7, %s1082
          %s1085 = sshll.u32 %s1075, 4
          %s1086 = int_to_ptr.vmem [resolvable:$true] %s1085
          %1088 = dma.vmem_to_hbm [thread:$0]  %s1086, 32, %s1083, %s1072
        $region56: #{tpu_custom_call.1} parent=47 // pred_fallthru
          _
      $region48: #{tpu_custom_call.1} parent=5 // pred_fallthru
        _
      %p1089 = scmp.le.s32.totalorder 2, %s19
      // Predicated region
      $region57: #{tpu_custom_call.1} parent=5 // pred_check
        %p1090 = pneg %p1089
      $region58: #{tpu_custom_call.1} parent=5 // pred_check_branch
        %1092 = sbr.rel (%p1090) target = $region60
      $region59: #{tpu_custom_call.1} parent=5 // pred_region
        %s1093 = ssub.s32 %s19, 2
        // Predicated region
        $region61: #{tpu_custom_call.1} parent=59 // pred_check
          %p1094 = pneg %p200
        $region62: #{tpu_custom_call.1} parent=59 // pred_check_branch
          %1096 = sbr.rel (%p1094) target = $region64
        $region63: #{tpu_custom_call.1} parent=59 // pred_region
          %s1097 = sand.u32 %s185, 1
          %s1098 = scalar_lea.sflag [#allocation5], %s1097
          %s1099 = sand.u32 %s185, 1
          %s1100 = smul.addr %s1099, 2
          %s1101 = scalar_lea.vmem [#allocation6], %s1100
          %1102 = dma.done %s1098, 32
        $region64: #{tpu_custom_call.1} parent=59 // pred_fallthru
          _
      $region60: #{tpu_custom_call.1} parent=5 // pred_fallthru
        _
    $region6: #{tpu_custom_call.1} parent=1 // loop_footer
      %s23 = sadd.s32 1, %s19
    $region7: #{tpu_custom_call.1} parent=1 // loop_footer_branch
      %18 = sbr.rel target = $region3
    $region8: #{tpu_custom_call.1} parent=1 // loop_exit
      _
    %1103 = vsyncpa [#allocation4], 1
    %s1104 = scalar_lea.sflag [#allocation4], 1
    %1105 = vsyncpa %s1104, 1
    %1106 = vsyncpa [#allocation5], 1
    %s1107 = scalar_lea.sflag [#allocation5], 1
    %1108 = vsyncpa %s1107, 1

</llo_original>
